<compile_context>
chip_gen: v6e
topology: v6e:2x2x1
jax: 0.10.0
libtpu: 0.0.40
codegen_flags: <defaults>
</compile_context>

<pallas_src>
import jax
import jax.numpy as jnp
from jax.experimental import pallas as pl
from jax.experimental.pallas import tpu as pltpu

LANE = 128        # lane width: last-dim padding granularity (lane-dense stores)
ROW_ALIGN = 16    # bf16 packs 16 rows per vreg -> batch tiles multiple of 16


def _round_up(x: int, m: int) -> int:
    return (x + m - 1) // m * m


def _ceil_div(a: int, b: int) -> int:
    return -(-a // b)


def _pad2d(a, rows: int, cols: int):
    return jnp.pad(a, ((0, rows - a.shape[0]), (0, cols - a.shape[1])))


def _mlp_kernel(x_ref, w1_ref, b1_ref, w2_ref, b2_ref, o_ref):
    # Cast to the MXU compute dtype inside the kernel (cheap VPU op on the
    # already-streamed tile) rather than in a separate wrapper HBM pass.
    x = x_ref[...].astype(w1_ref.dtype)
    # Hidden layer: bf16 matmul on the MXU with f32 accumulation.
    h = jnp.dot(x, w1_ref[...], preferred_element_type=jnp.float32)
    h = h + b1_ref[...]                                   # (TB, Hp) + (1, Hp), f32
    # sigmoid(h) = 0.5*tanh(0.5*h) + 0.5 : one EUP push (tanh) + cheap VPU
    # mul/add, kept in f32 (v5e's EUP has no bf16). Numerically stable.
    h = 0.5 * jnp.tanh(0.5 * h) + 0.5
    # Output layer: cast activations to bf16 for the MXU, f32 accumulate.
    out = jnp.dot(h.astype(w2_ref.dtype), w2_ref[...],
                  preferred_element_type=jnp.float32)
    o_ref[...] = (out + b2_ref[...]).astype(o_ref.dtype)


def prepare_simple_net_params(w1, b1, w2, b2, *, compute_dtype=jnp.bfloat16):
    """Pad + cast the parameters ONCE at init (hoisted out of the forward).

    w1: (D_in, H), b1: (H,), w2: (H, D_out), b2: (D_out,)
    (w1/w2 are the transposes of torch's linear.weight).
    Zero padding is exact: padded rows/cols contribute nothing to real outputs.
    """
    D_in, H = w1.shape
    D_out = w2.shape[1]
    Dp, Hp, Np = (_round_up(d, LANE) for d in (D_in, H, D_out))
    return {
        "w1": _pad2d(jnp.asarray(w1), Dp, Hp).astype(compute_dtype),
        "b1": _pad2d(jnp.asarray(b1).reshape(1, -1), 1, Hp).astype(jnp.float32),
        "w2": _pad2d(jnp.asarray(w2), Hp, Np).astype(compute_dtype),
        "b2": _pad2d(jnp.asarray(b2).reshape(1, -1), 1, Np).astype(jnp.float32),
        "dims": (D_in, H, D_out),
        "padded_dims": (Dp, Hp, Np),
        "compute_dtype": compute_dtype,
    }


def _choose_batch_tiling(B: int, batch_tile: int):
    """Pick a balanced batch tile (multiple of 16) with bounded padding waste."""
    tb_cap = max(ROW_ALIGN, _round_up(min(batch_tile, B), ROW_ALIGN))
    num_tiles = _ceil_div(B, tb_cap)
    if num_tiles == 1 and B >= 256:
        # Give v7x's second TensorCore work (near no-op cost on v5e/v6e).
        num_tiles = 2
    tb = _round_up(_ceil_div(B, num_tiles), ROW_ALIGN)   # balanced -> waste < 16 rows/tile
    b_pad = tb * num_tiles
    return tb, num_tiles, b_pad


def simple_net_forward(x, params, *, batch_tile=1024, out_dtype=jnp.float32,
                       return_padded=False, single_buffer_weights=True):
    """SimpleNet forward: sigmoid(x @ W1 + b1) @ W2 + b2.

    x: (B, D_in). Returns (B, D_out) in out_dtype (f32 default for torch
    parity; bf16 halves writeback). With return_padded=True the lane-padded
    (B_pad, Np) slab is returned so a downstream consumer can fuse the slice
    and skip an extra HBM round trip when D_out << 128.
    """
    B, D_in = x.shape
    d_in, _, d_out = params["dims"]
    Dp, Hp, Np = params["padded_dims"]
    assert D_in == d_in, f"x has D_in={D_in}, params expect {d_in}"
    w1_p, b1_p, w2_p, b2_p = params["w1"], params["b1"], params["w2"], params["b2"]
    compute_dtype = params["compute_dtype"]

    tb, num_tiles, b_pad = _choose_batch_tiling(B, batch_tile)

    if b_pad == B and Dp == D_in:
        # Already aligned: stream x as-is (no wrapper HBM pass); cast in-kernel.
        x_p = x
    else:
        # Cast first (halves the bytes the pad writes), then zero-pad.
        x_p = _pad2d(x.astype(compute_dtype), b_pad, Dp)

    x_itemsize = jnp.dtype(x_p.dtype).itemsize
    w_itemsize = jnp.dtype(compute_dtype).itemsize
    out_itemsize = jnp.dtype(out_dtype).itemsize

    # VMEM budget: double-buffered streamed x/out tiles, (at most) double-
    # buffered resident weights/biases, plus f32 in-kernel temporaries. 2x margin.
    buf_bytes = (2 * tb * Dp * x_itemsize
                 + 2 * tb * Np * out_itemsize
                 + 2 * (Dp * Hp + Hp * Np) * w_itemsize
                 + 2 * (Hp + Np) * 4
                 + tb * (Hp + Np) * 4)
    vmem_limit = int(min(max(2 * buf_bytes, 32 << 20), 64 << 20))

    cost = pl.CostEstimate(
        flops=2 * b_pad * (Dp * Hp + Hp * Np),
        transcendentals=b_pad * Hp,
        bytes_accessed=(x_p.size * x_itemsize
                        + w1_p.size * w_itemsize + w2_p.size * w_itemsize
                        + b1_p.size * 4 + b2_p.size * 4
                        + b_pad * Np * out_itemsize),
    )

    def build_call(use_single_buffer):
        resident_kw = {}
        if use_single_buffer and hasattr(pl, "Buffered"):
            # Block-invariant operands: double-buffering them is pure VMEM waste
            # (matters on v7x's 64 MiB VMEM once H / D_in grow).
            resident_kw = dict(pipeline_mode=pl.Buffered(1))
        in_specs = [
            pl.BlockSpec((tb, Dp), lambda i: (i, 0)),                  # x: batch-tiled
            pl.BlockSpec((Dp, Hp), lambda i: (0, 0), **resident_kw),   # W1 resident
            pl.BlockSpec((1, Hp), lambda i: (0, 0), **resident_kw),    # b1 resident
            pl.BlockSpec((Hp, Np), lambda i: (0, 0), **resident_kw),   # W2 resident
            pl.BlockSpec((1, Np), lambda i: (0, 0), **resident_kw),    # b2 resident
        ]
        return pl.pallas_call(
            _mlp_kernel,
            out_shape=jax.ShapeDtypeStruct((b_pad, Np), out_dtype),
            grid=(num_tiles,),
            in_specs=in_specs,
            out_specs=pl.BlockSpec((tb, Np), lambda i: (i, 0)),
            compiler_params=pltpu.CompilerParams(
                dimension_semantics=("parallel",),  # shard batch tiles over v7x's 2 TCs
                vmem_limit_bytes=vmem_limit,
            ),
            cost_estimate=cost,
        )

    try:
        out_padded = build_call(single_buffer_weights)(x_p, w1_p, b1_p, w2_p, b2_p)
    except Exception:
        # pl.Buffered(1) not accepted by this jax/Mosaic version -> fall back to
        # default (double-buffered) resident weights; only costs extra VMEM.
        out_padded = build_call(False)(x_p, w1_p, b1_p, w2_p, b2_p)

    if return_padded:
        return out_padded          # rows >= B / cols >= D_out are padding, mask downstream
    return out_padded[:B, :d_out]


if __name__ == "__main__":
    # Small shapes consistent with SimpleNet(D_in, H, D_out).
    B, D_in, H, D_out = 8, 16, 32, 4

    key = jax.random.PRNGKey(0)
    kx, kw1, kb1, kw2, kb2 = jax.random.split(key, 5)

    x = jax.random.normal(kx, (B, D_in), dtype=jnp.float32)

    # Deterministic parameter init (mimicking nn.Linear's uniform fan-in init).
    bound1 = 1.0 / jnp.sqrt(D_in)
    w1 = jax.random.uniform(kw1, (D_in, H), jnp.float32, -bound1, bound1)
    b1 = jax.random.uniform(kb1, (H,), jnp.float32, -bound1, bound1)
    bound2 = 1.0 / jnp.sqrt(H)
    w2 = jax.random.uniform(kw2, (H, D_out), jnp.float32, -bound2, bound2)
    b2 = jax.random.uniform(kb2, (D_out,), jnp.float32, -bound2, bound2)

    # Parameter prep (pad + bf16 cast) happens once here, NOT per forward call.
    params = prepare_simple_net_params(w1, b1, w2, b2)

    out = simple_net_forward(x, params)
    out = jax.block_until_ready(out)
    assert out.shape == (B, D_out)

    # Reference matching the kernel's bf16-input / f32-accumulate numerics.
    xb, w1b, w2b = (a.astype(jnp.bfloat16) for a in (x, w1, w2))
    h_ref = jax.nn.sigmoid(
        jnp.dot(xb, w1b, preferred_element_type=jnp.float32) + b1[None, :])
    ref = jnp.dot(h_ref.astype(jnp.bfloat16), w2b,
                  preferred_element_type=jnp.float32) + b2[None, :]
    assert jnp.allclose(out, ref, atol=2e-2, rtol=2e-2), (
        f"max abs err {jnp.max(jnp.abs(out - ref))}")

    print("KERNEL_OK")
</pallas_src>

<mosaic_0001>
module attributes {stable_mosaic.version = 11 : i64} {
  func.func @_mlp_kernel(%arg0: i32, %arg1: memref<16x128xbf16, #tpu.memory_space<vmem>>, %arg2: memref<128x128xbf16, #tpu.memory_space<vmem>>, %arg3: memref<1x128xf32, #tpu.memory_space<vmem>>, %arg4: memref<128x128xbf16, #tpu.memory_space<vmem>>, %arg5: memref<1x128xf32, #tpu.memory_space<vmem>>, %arg6: memref<16x128xf32, #tpu.memory_space<vmem>>) attributes {dimension_semantics = [#tpu.dimension_semantics<parallel>], iteration_bounds = array<i64: 1>, scalar_prefetch = 0 : i64, scratch_operands = 0 : i64, tpu.core_type = #tpu.core_type<tc>, window_params = [{transform_indices = @transform_0, window_bounds = array<i64: 16, 128>}, {pipeline_mode = #tpu.pipeline_mode<synchronous>, transform_indices = @transform_1, window_bounds = array<i64: 128, 128>}, {pipeline_mode = #tpu.pipeline_mode<synchronous>, transform_indices = @transform_2, window_bounds = array<i64: 1, 128>}, {pipeline_mode = #tpu.pipeline_mode<synchronous>, transform_indices = @transform_3, window_bounds = array<i64: 128, 128>}, {pipeline_mode = #tpu.pipeline_mode<synchronous>, transform_indices = @transform_4, window_bounds = array<i64: 1, 128>}, {transform_indices = @transform_5, window_bounds = array<i64: 16, 128>}]} {
    %c0 = arith.constant 0 : index
    %c0_0 = arith.constant 0 : index
    %0 = vector.load %arg1[%c0, %c0_0] : memref<16x128xbf16, #tpu.memory_space<vmem>>, vector<16x128xbf16>
    %c0_1 = arith.constant 0 : index
    %c0_2 = arith.constant 0 : index
    %1 = vector.load %arg2[%c0_1, %c0_2] : memref<128x128xbf16, #tpu.memory_space<vmem>>, vector<128x128xbf16>
    %cst = arith.constant dense<0.000000e+00> : vector<16x128xf32>
    %2 = tpu.matmul %0, %1, %cst {dimension_numbers = #tpu.dot_dimension_numbers<[1], [0], [0], [1], [0, 0, 1, 1], [], []>} : vector<16x128xbf16>, vector<128x128xbf16>, vector<16x128xf32> -> vector<16x128xf32>
    %c0_3 = arith.constant 0 : index
    %c0_4 = arith.constant 0 : index
    %3 = vector.load %arg3[%c0_3, %c0_4] : memref<1x128xf32, #tpu.memory_space<vmem>>, vector<1x128xf32>
    %4 = vector.broadcast %3 : vector<1x128xf32> to vector<16x128xf32>
    %5 = arith.addf %2, %4 : vector<16x128xf32>
    %cst_5 = arith.constant 5.000000e-01 : f32
    %6 = vector.broadcast %cst_5 : f32 to vector<16x128xf32>
    %7 = arith.mulf %6, %5 : vector<16x128xf32>
    %8 = math.tanh %7 : vector<16x128xf32>
    %cst_6 = arith.constant 5.000000e-01 : f32
    %9 = vector.broadcast %cst_6 : f32 to vector<16x128xf32>
    %10 = arith.mulf %9, %8 : vector<16x128xf32>
    %cst_7 = arith.constant 5.000000e-01 : f32
    %11 = vector.broadcast %cst_7 : f32 to vector<16x128xf32>
    %12 = arith.addf %10, %11 : vector<16x128xf32>
    %13 = arith.truncf %12 : vector<16x128xf32> to vector<16x128xbf16>
    %c0_8 = arith.constant 0 : index
    %c0_9 = arith.constant 0 : index
    %14 = vector.load %arg4[%c0_8, %c0_9] : memref<128x128xbf16, #tpu.memory_space<vmem>>, vector<128x128xbf16>
    %cst_10 = arith.constant dense<0.000000e+00> : vector<16x128xf32>
    %15 = tpu.matmul %13, %14, %cst_10 {dimension_numbers = #tpu.dot_dimension_numbers<[1], [0], [0], [1], [0, 0, 1, 1], [], []>} : vector<16x128xbf16>, vector<128x128xbf16>, vector<16x128xf32> -> vector<16x128xf32>
    %c0_11 = arith.constant 0 : index
    %c0_12 = arith.constant 0 : index
    %16 = vector.load %arg5[%c0_11, %c0_12] : memref<1x128xf32, #tpu.memory_space<vmem>>, vector<1x128xf32>
    %17 = vector.broadcast %16 : vector<1x128xf32> to vector<16x128xf32>
    %18 = arith.addf %15, %17 : vector<16x128xf32>
    %c0_13 = arith.constant 0 : index
    %c0_14 = arith.constant 0 : index
    %19 = vector.load %arg6[%c0_13, %c0_14] : memref<16x128xf32, #tpu.memory_space<vmem>>, vector<16x128xf32>
    tpu.vector_store %arg6[%c0_13, %c0_14], %18 {strides = array<i32>} : memref<16x128xf32, #tpu.memory_space<vmem>>, vector<16x128xf32>,
    return
  }
  func.func @transform_0(%arg0: i32) -> (i32, i32) {
    %c0_i32 = arith.constant 0 : i32
    %c0_i32_0 = arith.constant 0 : i32
    return %arg0, %c0_i32 : i32, i32
  }
  func.func @transform_1(%arg0: i32) -> (i32, i32) {
    %c0_i32 = arith.constant 0 : i32
    %c0_i32_0 = arith.constant 0 : i32
    %c0_i32_1 = arith.constant 0 : i32
    return %c0_i32, %c0_i32_0 : i32, i32
  }
  func.func @transform_2(%arg0: i32) -> (i32, i32) {
    %c0_i32 = arith.constant 0 : i32
    %c0_i32_0 = arith.constant 0 : i32
    %c0_i32_1 = arith.constant 0 : i32
    return %c0_i32, %c0_i32_0 : i32, i32
  }
  func.func @transform_3(%arg0: i32) -> (i32, i32) {
    %c0_i32 = arith.constant 0 : i32
    %c0_i32_0 = arith.constant 0 : i32
    %c0_i32_1 = arith.constant 0 : i32
    return %c0_i32, %c0_i32_0 : i32, i32
  }
  func.func @transform_4(%arg0: i32) -> (i32, i32) {
    %c0_i32 = arith.constant 0 : i32
    %c0_i32_0 = arith.constant 0 : i32
    %c0_i32_1 = arith.constant 0 : i32
    return %c0_i32, %c0_i32_0 : i32, i32
  }
  func.func @transform_5(%arg0: i32) -> (i32, i32) {
    %c0_i32 = arith.constant 0 : i32
    %c0_i32_0 = arith.constant 0 : i32
    return %arg0, %c0_i32 : i32, i32
  }
}

module attributes {stable_mosaic.version = 11 : i64} {
  func.func @_mlp_kernel(%arg0: i32, %arg1: memref<16x128xbf16, #tpu.memory_space<vmem>>, %arg2: memref<128x128xbf16, #tpu.memory_space<vmem>>, %arg3: memref<1x128xf32, #tpu.memory_space<vmem>>, %arg4: memref<128x128xbf16, #tpu.memory_space<vmem>>, %arg5: memref<1x128xf32, #tpu.memory_space<vmem>>, %arg6: memref<16x128xf32, #tpu.memory_space<vmem>>) attributes {dimension_semantics = [#tpu.dimension_semantics<parallel>], iteration_bounds = array<i64: 1>, scalar_prefetch = 0 : i64, scratch_operands = 0 : i64, tpu.core_type = #tpu.core_type<tc>, window_params = [{transform_indices = @transform_0, window_bounds = array<i64: 16, 128>}, {pipeline_mode = #tpu.pipeline_mode<synchronous>, transform_indices = @transform_1, window_bounds = array<i64: 128, 128>}, {pipeline_mode = #tpu.pipeline_mode<synchronous>, transform_indices = @transform_2, window_bounds = array<i64: 1, 128>}, {pipeline_mode = #tpu.pipeline_mode<synchronous>, transform_indices = @transform_3, window_bounds = array<i64: 128, 128>}, {pipeline_mode = #tpu.pipeline_mode<synchronous>, transform_indices = @transform_4, window_bounds = array<i64: 1, 128>}, {transform_indices = @transform_5, window_bounds = array<i64: 16, 128>}]} {
    %c0 = arith.constant 0 : index
    %c0_0 = arith.constant 0 : index
    %0 = vector.load %arg1[%c0, %c0_0] : memref<16x128xbf16, #tpu.memory_space<vmem>>, vector<16x128xbf16>
    %c0_1 = arith.constant 0 : index
    %c0_2 = arith.constant 0 : index
    %1 = vector.load %arg2[%c0_1, %c0_2] : memref<128x128xbf16, #tpu.memory_space<vmem>>, vector<128x128xbf16>
    %cst = arith.constant dense<0.000000e+00> : vector<16x128xf32>
    %2 = tpu.matmul %0, %1, %cst {dimension_numbers = #tpu.dot_dimension_numbers<[1], [0], [0], [1], [0, 0, 1, 1], [], []>} : vector<16x128xbf16>, vector<128x128xbf16>, vector<16x128xf32> -> vector<16x128xf32>
    %c0_3 = arith.constant 0 : index
    %c0_4 = arith.constant 0 : index
    %3 = vector.load %arg3[%c0_3, %c0_4] : memref<1x128xf32, #tpu.memory_space<vmem>>, vector<1x128xf32>
    %4 = vector.broadcast %3 : vector<1x128xf32> to vector<16x128xf32>
    %5 = arith.addf %2, %4 : vector<16x128xf32>
    %cst_5 = arith.constant 5.000000e-01 : f32
    %6 = vector.broadcast %cst_5 : f32 to vector<16x128xf32>
    %7 = arith.mulf %6, %5 : vector<16x128xf32>
    %8 = math.tanh %7 : vector<16x128xf32>
    %cst_6 = arith.constant 5.000000e-01 : f32
    %9 = vector.broadcast %cst_6 : f32 to vector<16x128xf32>
    %10 = arith.mulf %9, %8 : vector<16x128xf32>
    %cst_7 = arith.constant 5.000000e-01 : f32
    %11 = vector.broadcast %cst_7 : f32 to vector<16x128xf32>
    %12 = arith.addf %10, %11 : vector<16x128xf32>
    %13 = arith.truncf %12 : vector<16x128xf32> to vector<16x128xbf16>
    %c0_8 = arith.constant 0 : index
    %c0_9 = arith.constant 0 : index
    %14 = vector.load %arg4[%c0_8, %c0_9] : memref<128x128xbf16, #tpu.memory_space<vmem>>, vector<128x128xbf16>
    %cst_10 = arith.constant dense<0.000000e+00> : vector<16x128xf32>
    %15 = tpu.matmul %13, %14, %cst_10 {dimension_numbers = #tpu.dot_dimension_numbers<[1], [0], [0], [1], [0, 0, 1, 1], [], []>} : vector<16x128xbf16>, vector<128x128xbf16>, vector<16x128xf32> -> vector<16x128xf32>
    %c0_11 = arith.constant 0 : index
    %c0_12 = arith.constant 0 : index
    %16 = vector.load %arg5[%c0_11, %c0_12] : memref<1x128xf32, #tpu.memory_space<vmem>>, vector<1x128xf32>
    %17 = vector.broadcast %16 : vector<1x128xf32> to vector<16x128xf32>
    %18 = arith.addf %15, %17 : vector<16x128xf32>
    %c0_13 = arith.constant 0 : index
    %c0_14 = arith.constant 0 : index
    %19 = vector.load %arg6[%c0_13, %c0_14] : memref<16x128xf32, #tpu.memory_space<vmem>>, vector<16x128xf32>
    tpu.vector_store %arg6[%c0_13, %c0_14], %18 {strides = array<i32>} : memref<16x128xf32, #tpu.memory_space<vmem>>, vector<16x128xf32>,
    return
  }
  func.func @transform_0(%arg0: i32) -> (i32, i32) {
    %c0_i32 = arith.constant 0 : i32
    %c0_i32_0 = arith.constant 0 : i32
    return %arg0, %c0_i32 : i32, i32
  }
  func.func @transform_1(%arg0: i32) -> (i32, i32) {
    %c0_i32 = arith.constant 0 : i32
    %c0_i32_0 = arith.constant 0 : i32
    %c0_i32_1 = arith.constant 0 : i32
    return %c0_i32, %c0_i32_0 : i32, i32
  }
  func.func @transform_2(%arg0: i32) -> (i32, i32) {
    %c0_i32 = arith.constant 0 : i32
    %c0_i32_0 = arith.constant 0 : i32
    %c0_i32_1 = arith.constant 0 : i32
    return %c0_i32, %c0_i32_0 : i32, i32
  }
  func.func @transform_3(%arg0: i32) -> (i32, i32) {
    %c0_i32 = arith.constant 0 : i32
    %c0_i32_0 = arith.constant 0 : i32
    %c0_i32_1 = arith.constant 0 : i32
    return %c0_i32, %c0_i32_0 : i32, i32
  }
  func.func @transform_4(%arg0: i32) -> (i32, i32) {
    %c0_i32 = arith.constant 0 : i32
    %c0_i32_0 = arith.constant 0 : i32
    %c0_i32_1 = arith.constant 0 : i32
    return %c0_i32, %c0_i32_0 : i32, i32
  }
  func.func @transform_5(%arg0: i32) -> (i32, i32) {
    %c0_i32 = arith.constant 0 : i32
    %c0_i32_0 = arith.constant 0 : i32
    return %arg0, %c0_i32 : i32, i32
  }
}

</mosaic_0001>

<llo_original>
// kernel: tpu_custom_call.1
$region0: #{tpu_custom_call.1}
  #allocation0 [shape = 'u32[]', space=smem, size = 0x4, offset = 0x4, fixed_abs, tag = 'smem constant byte address 0x4 - core index']
  #allocation1 [shape = 'u32[144,128]{1,0:T(1,128)}', space=vmem, size = 0x12000, scoped, tag = 'internal scratch']
  %s0 = inlined_call_operand.hbm [shape: bf16[16,128], index: 0, kind: input, shape index: {}]
  %s1 = inlined_call_operand.hbm [shape: bf16[128,128], index: 1, kind: input, shape index: {}]
  %s2 = inlined_call_operand.vmem [shape: f32[1,128], index: 2, kind: input, shape index: {}]
  %s3 = inlined_call_operand.hbm [shape: bf16[128,128], index: 3, kind: input, shape index: {}]
  %s4 = inlined_call_operand.vmem [shape: f32[1,128], index: 4, kind: input, shape index: {}]
  %s5 = inlined_call_operand.hbm [shape: f32[16,128], index: 5, kind: output, shape index: {}]
  %s6 = sld [smem:[#allocation0]]
  $region42: #{tpu_custom_call.1} parent=0
    _
  %s8 = ssub.s32 1, %s6
  %s9 = scalar_select 0, %s8, %s6
  $region1: #{tpu_custom_call.1} parent=0
    #allocation2 [shape = 'u8[4096]{0}', space=vmem, size = 0x1000, scoped, tag = 'input window, operand 0, single buffered']
    #allocation3 [shape = 's32[1]{0}', space=sflag, size = 0x4, scoped, tag = 'scoped memory for tpu_custom_call.1']
    #allocation4 [shape = 's32[1]{0}', space=sflag, size = 0x4, scoped, tag = 'scoped memory for tpu_custom_call.1']
    #allocation5 [shape = 'u8[32768]{0}', space=vmem, size = 0x8000, scoped, tag = 'input window, operand 1, single buffered']
    #allocation6 [shape = 's32[1]{0}', space=sflag, size = 0x4, scoped, tag = 'scoped memory for tpu_custom_call.1']
    #allocation7 [shape = 'u8[32768]{0}', space=vmem, size = 0x8000, scoped, tag = 'input window, operand 3, single buffered']
    #allocation8 [shape = 'u8[8192]{0}', space=vmem, size = 0x2000, scoped, tag = 'output window, operand 0, single buffered']
    %10 = vsyncpa [#allocation3], 0
    %11 = vsyncpa [#allocation6], 0
    %12 = vsyncpa [#allocation4], 0
    // Predicated region
    $region2: #{tpu_custom_call.1} parent=1 // pred_check
      _
    $region3: #{tpu_custom_call.1} parent=1 // pred_check_branch
      %14 = sbr.rel (0) target = $region5
    $region4: #{tpu_custom_call.1} parent=1 // pred_region
      %s16 = ssub.s32 128, 128
      %17 = vsyncadd [#allocation3], %s16
      %s18 = sshll.u32 [#allocation2], 4
      %s19 = int_to_ptr.vmem [resolvable:$true] %s18
      %24 = dma.hbm_to_vmem [thread:$0]  %s0, 128, %s19, [#allocation3], 64, 64, 4
    $region5: #{tpu_custom_call.1} parent=1 // pred_fallthru
      _
    // Predicated region
    $region6: #{tpu_custom_call.1} parent=1 // pred_check
      _
    $region7: #{tpu_custom_call.1} parent=1 // pred_check_branch
      %26 = sbr.rel (0) target = $region9
    $region8: #{tpu_custom_call.1} parent=1 // pred_region
      %s28 = ssub.s32 1024, 1024
      %29 = vsyncadd [#allocation6], %s28
      %s30 = sshll.u32 [#allocation5], 4
      %s31 = int_to_ptr.vmem [resolvable:$true] %s30
      %36 = dma.hbm_to_vmem [thread:$0]  %s1, 1024, %s31, [#allocation6], 64, 64, 4
    $region9: #{tpu_custom_call.1} parent=1 // pred_fallthru
      _
    // Predicated region
    $region10: #{tpu_custom_call.1} parent=1 // pred_check
      _
    $region11: #{tpu_custom_call.1} parent=1 // pred_check_branch
      %38 = sbr.rel (0) target = $region13
    $region12: #{tpu_custom_call.1} parent=1 // pred_region
      _
    $region13: #{tpu_custom_call.1} parent=1 // pred_fallthru
      _
    // Predicated region
    $region14: #{tpu_custom_call.1} parent=1 // pred_check
      _
    $region15: #{tpu_custom_call.1} parent=1 // pred_check_branch
      %40 = sbr.rel (0) target = $region17
    $region16: #{tpu_custom_call.1} parent=1 // pred_region
      %s42 = ssub.s32 1024, 1024
      %43 = vsyncadd [#allocation6], %s42
      %s44 = sshll.u32 [#allocation7], 4
      %s45 = int_to_ptr.vmem [resolvable:$true] %s44
      %50 = dma.hbm_to_vmem [thread:$0]  %s3, 1024, %s45, [#allocation6], 64, 64, 4
    $region17: #{tpu_custom_call.1} parent=1 // pred_fallthru
      _
    // Predicated region
    $region18: #{tpu_custom_call.1} parent=1 // pred_check
      _
    $region19: #{tpu_custom_call.1} parent=1 // pred_check_branch
      %52 = sbr.rel (0) target = $region21
    $region20: #{tpu_custom_call.1} parent=1 // pred_region
      _
    $region21: #{tpu_custom_call.1} parent=1 // pred_fallthru
      _
    // Predicated region
    $region22: #{tpu_custom_call.1} parent=1 // pred_check
      _
    $region23: #{tpu_custom_call.1} parent=1 // pred_check_branch
      %54 = sbr.rel (0) target = $region25
    $region24: #{tpu_custom_call.1} parent=1 // pred_region
      %55 = dma.done [#allocation3], 128
    $region25: #{tpu_custom_call.1} parent=1 // pred_fallthru
      _
    // Predicated region
    $region26: #{tpu_custom_call.1} parent=1 // pred_check
      _
    $region27: #{tpu_custom_call.1} parent=1 // pred_check_branch
      %57 = sbr.rel (0) target = $region29
    $region28: #{tpu_custom_call.1} parent=1 // pred_region
      %58 = dma.done [#allocation6], 1024
    $region29: #{tpu_custom_call.1} parent=1 // pred_fallthru
      _
    // Predicated region
    $region30: #{tpu_custom_call.1} parent=1 // pred_check
      _
    $region31: #{tpu_custom_call.1} parent=1 // pred_check_branch
      %60 = sbr.rel (0) target = $region33
    $region32: #{tpu_custom_call.1} parent=1 // pred_region
      %61 = dma.done [#allocation6], 1024
    $region33: #{tpu_custom_call.1} parent=1 // pred_fallthru
      _
    %v63 = vld [vmem:[#allocation2] sm:$0xf]
    %v64 = vld [vmem:[#allocation2 + $0x4] sm:$0xf]
    %v65 = vld [vmem:[#allocation5] sm:$0xf]
    %v66 = vld [vmem:[#allocation5 + $0x4] sm:$0xf]
    %v67 = vld [vmem:[#allocation5 + $0x8] sm:$0xf]
    %v68 = vld [vmem:[#allocation5 + $0xc] sm:$0xf]
    %v69 = vld [vmem:[#allocation5 + $0x10] sm:$0xf]
    %v70 = vld [vmem:[#allocation5 + $0x14] sm:$0xf]
    %v71 = vld [vmem:[#allocation5 + $0x18] sm:$0xf]
    %v72 = vld [vmem:[#allocation5 + $0x1c] sm:$0xf]
    %v73 = vld [vmem:[#allocation5 + $0x20] sm:$0xf]
    %v74 = vld [vmem:[#allocation5 + $0x24] sm:$0xf]
    %v75 = vld [vmem:[#allocation5 + $0x28] sm:$0xf]
    %v76 = vld [vmem:[#allocation5 + $0x2c] sm:$0xf]
    %v77 = vld [vmem:[#allocation5 + $0x30] sm:$0xf]
    %v78 = vld [vmem:[#allocation5 + $0x34] sm:$0xf]
    %v79 = vld [vmem:[#allocation5 + $0x38] sm:$0xf]
    %v80 = vld [vmem:[#allocation5 + $0x3c] sm:$0xf]
    %v81 = vld [vmem:[%s2] sm:$0x1]
    %v83 = vlaneseq
    %v84 = vshrl.u32 %v83, 7
    %v85 = vsub.s32 0, %v84
    %v86 = vrot.slane %v81, %v85
    %v90 = vunpack.c.l.b16 %v63
    %v91 = vunpack.c.l.b16 %v64
    %v92 = vpack.c.b16 %v91, %v90
    %v110 = vunpack.c.l.b16 %v65
    %v111 = vunpack.c.l.b16 %v66
    %v112 = vunpack.c.l.b16 %v67
    %v113 = vunpack.c.l.b16 %v68
    %v114 = vunpack.c.l.b16 %v69
    %v115 = vunpack.c.l.b16 %v70
    %v116 = vunpack.c.l.b16 %v71
    %v117 = vunpack.c.l.b16 %v72
    %v118 = vunpack.c.l.b16 %v73
    %v119 = vunpack.c.l.b16 %v74
    %v120 = vunpack.c.l.b16 %v75
    %v121 = vunpack.c.l.b16 %v76
    %v122 = vunpack.c.l.b16 %v77
    %v123 = vunpack.c.l.b16 %v78
    %v124 = vunpack.c.l.b16 %v79
    %v125 = vunpack.c.l.b16 %v80
    %v126 = vpack.c.b16 %v111, %v110
    %v127 = vpack.c.b16 %v113, %v112
    %v128 = vpack.c.b16 %v115, %v114
    %v129 = vpack.c.b16 %v117, %v116
    %v130 = vpack.c.b16 %v119, %v118
    %v131 = vpack.c.b16 %v121, %v120
    %v132 = vpack.c.b16 %v123, %v122
    %v133 = vpack.c.b16 %v125, %v124
    %142 = vmatprep.subr.bf16.mxu0 0
    %143 = vmatpush1.bf16.msra.mxu0 %v133
    %144 = vmatprep.subr.bf16.mxu0 0
    %145 = vmatpush1.bf16.msra.mxu0 %v132
    %146 = vmatprep.subr.bf16.mxu0 0
    %147 = vmatpush1.bf16.msra.mxu0 %v131
    %148 = vmatprep.subr.bf16.mxu0 0
    %149 = vmatpush1.bf16.msra.mxu0 %v130
    %150 = vmatprep.subr.bf16.mxu0 0
    %151 = vmatpush1.bf16.msra.mxu0 %v129
    %152 = vmatprep.subr.bf16.mxu0 0
    %153 = vmatpush1.bf16.msra.mxu0 %v128
    %154 = vmatprep.subr.bf16.mxu0 0
    %155 = vmatpush1.bf16.msra.mxu0 %v127
    %156 = vmatprep.subr.bf16.mxu0 0
    %157 = vmatpush1.bf16.msra.mxu0 %v126
    %158 = vmatprep.subr.bf16.mxu0 0
    %159 = vmatpush2.bf16.msra.mxu0 0
    %160 = vmatprep.subr.bf16.mxu0 0
    %161 = vmatpush2.bf16.msra.mxu0 0
    %162 = vmatprep.subr.bf16.mxu0 0
    %163 = vmatpush2.bf16.msra.mxu0 0
    %164 = vmatprep.subr.bf16.mxu0 0
    %165 = vmatpush2.bf16.msra.mxu0 0
    %166 = vmatprep.subr.bf16.mxu0 0
    %167 = vmatpush2.bf16.msra.mxu0 0
    %168 = vmatprep.subr.bf16.mxu0 0
    %169 = vmatpush2.bf16.msra.mxu0 0
    %170 = vmatprep.subr.bf16.mxu0 0
    %171 = vmatpush2.bf16.msra.mxu0 0
    %172 = vmatprep.subr.bf16.mxu0 0
    %173 = vmatpush2.bf16.msra.mxu0 0
    %174 = vmatprep.mubr.bf16.mxu0 0
    %175 = vmatmul.mubr.bf16.gmra.mxu0 %v92
    %v176 = vpop.f32.mrf.mxu0
    %v177 = vadd.f32 %v86, %v176
    %v178 = vpop.f32.mrf.mxu0
    %v179 = vpop.f32.mrf.mxu0
    %v180 = vadd.f32 %v86, %v179
    %v181 = vpop.f32.mrf.mxu0
    %182 = vdwg.mxu0
    %v183 = vmul.f32 %v177, 0.5
    %v184 = vmul.f32 %v180, 0.5
    %v185 = vtanh.pop %v183
    %v186 = vtanh.pop %v184
    %v187 = vmul.f32 %v185, 0.5
    %v188 = vmul.f32 %v186, 0.5
    %v189 = vadd.f32 %v187, 0.5
    %v190 = vadd.f32 %v188, 0.5
    %v191 = vpack.c.bf16 %v190, %v189
    %v192 = vld [vmem:[#allocation7] sm:$0xf]
    %v193 = vld [vmem:[#allocation7 + $0x4] sm:$0xf]
    %v194 = vld [vmem:[#allocation7 + $0x8] sm:$0xf]
    %v195 = vld [vmem:[#allocation7 + $0xc] sm:$0xf]
    %v196 = vld [vmem:[#allocation7 + $0x10] sm:$0xf]
    %v197 = vld [vmem:[#allocation7 + $0x14] sm:$0xf]
    %v198 = vld [vmem:[#allocation7 + $0x18] sm:$0xf]
    %v199 = vld [vmem:[#allocation7 + $0x1c] sm:$0xf]
    %v200 = vld [vmem:[#allocation7 + $0x20] sm:$0xf]
    %v201 = vld [vmem:[#allocation7 + $0x24] sm:$0xf]
    %v202 = vld [vmem:[#allocation7 + $0x28] sm:$0xf]
    %v203 = vld [vmem:[#allocation7 + $0x2c] sm:$0xf]
    %v204 = vld [vmem:[#allocation7 + $0x30] sm:$0xf]
    %v205 = vld [vmem:[#allocation7 + $0x34] sm:$0xf]
    %v206 = vld [vmem:[#allocation7 + $0x38] sm:$0xf]
    %v207 = vld [vmem:[#allocation7 + $0x3c] sm:$0xf]
    %v208 = vld [vmem:[%s4] sm:$0x1]
    %v210 = vlaneseq
    %v211 = vshrl.u32 %v210, 7
    %v212 = vsub.s32 0, %v211
    %v213 = vrot.slane %v208, %v212
    %v231 = vunpack.c.l.b16 %v192
    %v232 = vunpack.c.l.b16 %v193
    %v233 = vunpack.c.l.b16 %v194
    %v234 = vunpack.c.l.b16 %v195
    %v235 = vunpack.c.l.b16 %v196
    %v236 = vunpack.c.l.b16 %v197
    %v237 = vunpack.c.l.b16 %v198
    %v238 = vunpack.c.l.b16 %v199
    %v239 = vunpack.c.l.b16 %v200
    %v240 = vunpack.c.l.b16 %v201
    %v241 = vunpack.c.l.b16 %v202
    %v242 = vunpack.c.l.b16 %v203
    %v243 = vunpack.c.l.b16 %v204
    %v244 = vunpack.c.l.b16 %v205
    %v245 = vunpack.c.l.b16 %v206
    %v246 = vunpack.c.l.b16 %v207
    %v247 = vpack.c.b16 %v232, %v231
    %v248 = vpack.c.b16 %v234, %v233
    %v249 = vpack.c.b16 %v236, %v235
    %v250 = vpack.c.b16 %v238, %v237
    %v251 = vpack.c.b16 %v240, %v239
    %v252 = vpack.c.b16 %v242, %v241
    %v253 = vpack.c.b16 %v244, %v243
    %v254 = vpack.c.b16 %v246, %v245
    %263 = vmatprep.subr.bf16.mxu0 0
    %264 = vmatpush1.bf16.msra.mxu0 %v254
    %265 = vmatprep.subr.bf16.mxu0 0
    %266 = vmatpush1.bf16.msra.mxu0 %v253
    %267 = vmatprep.subr.bf16.mxu0 0
    %268 = vmatpush1.bf16.msra.mxu0 %v252
    %269 = vmatprep.subr.bf16.mxu0 0
    %270 = vmatpush1.bf16.msra.mxu0 %v251
    %271 = vmatprep.subr.bf16.mxu0 0
    %272 = vmatpush1.bf16.msra.mxu0 %v250
    %273 = vmatprep.subr.bf16.mxu0 0
    %274 = vmatpush1.bf16.msra.mxu0 %v249
    %275 = vmatprep.subr.bf16.mxu0 0
    %276 = vmatpush1.bf16.msra.mxu0 %v248
    %277 = vmatprep.subr.bf16.mxu0 0
    %278 = vmatpush1.bf16.msra.mxu0 %v247
    %279 = vmatprep.subr.bf16.mxu0 0
    %280 = vmatpush2.bf16.msra.mxu0 0
    %281 = vmatprep.subr.bf16.mxu0 0
    %282 = vmatpush2.bf16.msra.mxu0 0
    %283 = vmatprep.subr.bf16.mxu0 0
    %284 = vmatpush2.bf16.msra.mxu0 0
    %285 = vmatprep.subr.bf16.mxu0 0
    %286 = vmatpush2.bf16.msra.mxu0 0
    %287 = vmatprep.subr.bf16.mxu0 0
    %288 = vmatpush2.bf16.msra.mxu0 0
    %289 = vmatprep.subr.bf16.mxu0 0
    %290 = vmatpush2.bf16.msra.mxu0 0
    %291 = vmatprep.subr.bf16.mxu0 0
    %292 = vmatpush2.bf16.msra.mxu0 0
    %293 = vmatprep.subr.bf16.mxu0 0
    %294 = vmatpush2.bf16.msra.mxu0 0
    %295 = vmatprep.mubr.bf16.mxu0 0
    %296 = vmatmul.mubr.bf16.gmra.mxu0 %v191
    %v297 = vpop.f32.mrf.mxu0
    %v298 = vadd.f32 %v213, %v297
    %v299 = vpop.f32.mrf.mxu0
    %v300 = vpop.f32.mrf.mxu0
    %v301 = vadd.f32 %v213, %v300
    %v302 = vpop.f32.mrf.mxu0
    %303 = vdwg.mxu0
    %304 = vst [vmem:[#allocation8] sm:$0xff] %v298
    %305 = vst [vmem:[#allocation8 + $0x8] sm:$0xff] %v301
    // Predicated region
    $region34: #{tpu_custom_call.1} parent=1 // pred_check
      _
    $region35: #{tpu_custom_call.1} parent=1 // pred_check_branch
      %307 = sbr.rel (0) target = $region37
    $region36: #{tpu_custom_call.1} parent=1 // pred_region
      %s309 = ssub.s32 256, 256
      %310 = vsyncadd [#allocation4], %s309
      %s311 = sshll.u32 [#allocation8], 4
      %s312 = int_to_ptr.vmem [resolvable:$true] %s311
      %317 = dma.vmem_to_hbm [thread:$0]  %s312, 256, %s5, [#allocation4], 128, 128, 8
    $region37: #{tpu_custom_call.1} parent=1 // pred_fallthru
      _
    // Predicated region
    $region38: #{tpu_custom_call.1} parent=1 // pred_check
      _
    $region39: #{tpu_custom_call.1} parent=1 // pred_check_branch
      %319 = sbr.rel (0) target = $region41
    $region40: #{tpu_custom_call.1} parent=1 // pred_region
      %320 = dma.done [#allocation4], 256
    $region41: #{tpu_custom_call.1} parent=1 // pred_fallthru
      _
    %321 = vsyncpa [#allocation3], 1
    %322 = vsyncpa [#allocation6], 1
    %323 = vsyncpa [#allocation4], 1

// kernel: tpu_custom_call.1
$region0: #{tpu_custom_call.1}
  #allocation0 [shape = 'u32[]', space=smem, size = 0x4, offset = 0x4, fixed_abs, tag = 'smem constant byte address 0x4 - core index']
  #allocation1 [shape = 'u32[144,128]{1,0:T(1,128)}', space=vmem, size = 0x12000, scoped, tag = 'internal scratch']
  %s0 = inlined_call_operand.hbm [shape: bf16[16,128], index: 0, kind: input, shape index: {}]
  %s1 = inlined_call_operand.hbm [shape: bf16[128,128], index: 1, kind: input, shape index: {}]
  %s2 = inlined_call_operand.vmem [shape: f32[1,128], index: 2, kind: input, shape index: {}]
  %s3 = inlined_call_operand.hbm [shape: bf16[128,128], index: 3, kind: input, shape index: {}]
  %s4 = inlined_call_operand.vmem [shape: f32[1,128], index: 4, kind: input, shape index: {}]
  %s5 = inlined_call_operand.hbm [shape: f32[16,128], index: 5, kind: output, shape index: {}]
  %s6 = sld [smem:[#allocation0]]
  $region42: #{tpu_custom_call.1} parent=0
    _
  %s8 = ssub.s32 1, %s6
  %s9 = scalar_select 0, %s8, %s6
  $region1: #{tpu_custom_call.1} parent=0
    #allocation2 [shape = 'u8[4096]{0}', space=vmem, size = 0x1000, scoped, tag = 'input window, operand 0, single buffered']
    #allocation3 [shape = 's32[1]{0}', space=sflag, size = 0x4, scoped, tag = 'scoped memory for tpu_custom_call.1']
    #allocation4 [shape = 's32[1]{0}', space=sflag, size = 0x4, scoped, tag = 'scoped memory for tpu_custom_call.1']
    #allocation5 [shape = 'u8[32768]{0}', space=vmem, size = 0x8000, scoped, tag = 'input window, operand 1, single buffered']
    #allocation6 [shape = 's32[1]{0}', space=sflag, size = 0x4, scoped, tag = 'scoped memory for tpu_custom_call.1']
    #allocation7 [shape = 'u8[32768]{0}', space=vmem, size = 0x8000, scoped, tag = 'input window, operand 3, single buffered']
    #allocation8 [shape = 'u8[8192]{0}', space=vmem, size = 0x2000, scoped, tag = 'output window, operand 0, single buffered']
    %10 = vsyncpa [#allocation3], 0
    %11 = vsyncpa [#allocation6], 0
    %12 = vsyncpa [#allocation4], 0
    // Predicated region
    $region2: #{tpu_custom_call.1} parent=1 // pred_check
      _
    $region3: #{tpu_custom_call.1} parent=1 // pred_check_branch
      %14 = sbr.rel (0) target = $region5
    $region4: #{tpu_custom_call.1} parent=1 // pred_region
      %s16 = ssub.s32 128, 128
      %17 = vsyncadd [#allocation3], %s16
      %s18 = sshll.u32 [#allocation2], 4
      %s19 = int_to_ptr.vmem [resolvable:$true] %s18
      %24 = dma.hbm_to_vmem [thread:$0]  %s0, 128, %s19, [#allocation3], 64, 64, 4
    $region5: #{tpu_custom_call.1} parent=1 // pred_fallthru
      _
    // Predicated region
    $region6: #{tpu_custom_call.1} parent=1 // pred_check
      _
    $region7: #{tpu_custom_call.1} parent=1 // pred_check_branch
      %26 = sbr.rel (0) target = $region9
    $region8: #{tpu_custom_call.1} parent=1 // pred_region
      %s28 = ssub.s32 1024, 1024
      %29 = vsyncadd [#allocation6], %s28
      %s30 = sshll.u32 [#allocation5], 4
      %s31 = int_to_ptr.vmem [resolvable:$true] %s30
      %36 = dma.hbm_to_vmem [thread:$0]  %s1, 1024, %s31, [#allocation6], 64, 64, 4
    $region9: #{tpu_custom_call.1} parent=1 // pred_fallthru
      _
    // Predicated region
    $region10: #{tpu_custom_call.1} parent=1 // pred_check
      _
    $region11: #{tpu_custom_call.1} parent=1 // pred_check_branch
      %38 = sbr.rel (0) target = $region13
    $region12: #{tpu_custom_call.1} parent=1 // pred_region
      _
    $region13: #{tpu_custom_call.1} parent=1 // pred_fallthru
      _
    // Predicated region
    $region14: #{tpu_custom_call.1} parent=1 // pred_check
      _
    $region15: #{tpu_custom_call.1} parent=1 // pred_check_branch
      %40 = sbr.rel (0) target = $region17
    $region16: #{tpu_custom_call.1} parent=1 // pred_region
      %s42 = ssub.s32 1024, 1024
      %43 = vsyncadd [#allocation6], %s42
      %s44 = sshll.u32 [#allocation7], 4
      %s45 = int_to_ptr.vmem [resolvable:$true] %s44
      %50 = dma.hbm_to_vmem [thread:$0]  %s3, 1024, %s45, [#allocation6], 64, 64, 4
    $region17: #{tpu_custom_call.1} parent=1 // pred_fallthru
      _
    // Predicated region
    $region18: #{tpu_custom_call.1} parent=1 // pred_check
      _
    $region19: #{tpu_custom_call.1} parent=1 // pred_check_branch
      %52 = sbr.rel (0) target = $region21
    $region20: #{tpu_custom_call.1} parent=1 // pred_region
      _
    $region21: #{tpu_custom_call.1} parent=1 // pred_fallthru
      _
    // Predicated region
    $region22: #{tpu_custom_call.1} parent=1 // pred_check
      _
    $region23: #{tpu_custom_call.1} parent=1 // pred_check_branch
      %54 = sbr.rel (0) target = $region25
    $region24: #{tpu_custom_call.1} parent=1 // pred_region
      %55 = dma.done [#allocation3], 128
    $region25: #{tpu_custom_call.1} parent=1 // pred_fallthru
      _
    // Predicated region
    $region26: #{tpu_custom_call.1} parent=1 // pred_check
      _
    $region27: #{tpu_custom_call.1} parent=1 // pred_check_branch
      %57 = sbr.rel (0) target = $region29
    $region28: #{tpu_custom_call.1} parent=1 // pred_region
      %58 = dma.done [#allocation6], 1024
    $region29: #{tpu_custom_call.1} parent=1 // pred_fallthru
      _
    // Predicated region
    $region30: #{tpu_custom_call.1} parent=1 // pred_check
      _
    $region31: #{tpu_custom_call.1} parent=1 // pred_check_branch
      %60 = sbr.rel (0) target = $region33
    $region32: #{tpu_custom_call.1} parent=1 // pred_region
      %61 = dma.done [#allocation6], 1024
    $region33: #{tpu_custom_call.1} parent=1 // pred_fallthru
      _
    %v63 = vld [vmem:[#allocation2] sm:$0xf]
    %v64 = vld [vmem:[#allocation2 + $0x4] sm:$0xf]
    %v65 = vld [vmem:[#allocation5] sm:$0xf]
    %v66 = vld [vmem:[#allocation5 + $0x4] sm:$0xf]
    %v67 = vld [vmem:[#allocation5 + $0x8] sm:$0xf]
    %v68 = vld [vmem:[#allocation5 + $0xc] sm:$0xf]
    %v69 = vld [vmem:[#allocation5 + $0x10] sm:$0xf]
    %v70 = vld [vmem:[#allocation5 + $0x14] sm:$0xf]
    %v71 = vld [vmem:[#allocation5 + $0x18] sm:$0xf]
    %v72 = vld [vmem:[#allocation5 + $0x1c] sm:$0xf]
    %v73 = vld [vmem:[#allocation5 + $0x20] sm:$0xf]
    %v74 = vld [vmem:[#allocation5 + $0x24] sm:$0xf]
    %v75 = vld [vmem:[#allocation5 + $0x28] sm:$0xf]
    %v76 = vld [vmem:[#allocation5 + $0x2c] sm:$0xf]
    %v77 = vld [vmem:[#allocation5 + $0x30] sm:$0xf]
    %v78 = vld [vmem:[#allocation5 + $0x34] sm:$0xf]
    %v79 = vld [vmem:[#allocation5 + $0x38] sm:$0xf]
    %v80 = vld [vmem:[#allocation5 + $0x3c] sm:$0xf]
    %v81 = vld [vmem:[%s2] sm:$0x1]
    %v83 = vlaneseq
    %v84 = vshrl.u32 %v83, 7
    %v85 = vsub.s32 0, %v84
    %v86 = vrot.slane %v81, %v85
    %v90 = vunpack.c.l.b16 %v63
    %v91 = vunpack.c.l.b16 %v64
    %v92 = vpack.c.b16 %v91, %v90
    %v110 = vunpack.c.l.b16 %v65
    %v111 = vunpack.c.l.b16 %v66
    %v112 = vunpack.c.l.b16 %v67
    %v113 = vunpack.c.l.b16 %v68
    %v114 = vunpack.c.l.b16 %v69
    %v115 = vunpack.c.l.b16 %v70
    %v116 = vunpack.c.l.b16 %v71
    %v117 = vunpack.c.l.b16 %v72
    %v118 = vunpack.c.l.b16 %v73
    %v119 = vunpack.c.l.b16 %v74
    %v120 = vunpack.c.l.b16 %v75
    %v121 = vunpack.c.l.b16 %v76
    %v122 = vunpack.c.l.b16 %v77
    %v123 = vunpack.c.l.b16 %v78
    %v124 = vunpack.c.l.b16 %v79
    %v125 = vunpack.c.l.b16 %v80
    %v126 = vpack.c.b16 %v111, %v110
    %v127 = vpack.c.b16 %v113, %v112
    %v128 = vpack.c.b16 %v115, %v114
    %v129 = vpack.c.b16 %v117, %v116
    %v130 = vpack.c.b16 %v119, %v118
    %v131 = vpack.c.b16 %v121, %v120
    %v132 = vpack.c.b16 %v123, %v122
    %v133 = vpack.c.b16 %v125, %v124
    %142 = vmatprep.subr.bf16.mxu0 0
    %143 = vmatpush1.bf16.msra.mxu0 %v133
    %144 = vmatprep.subr.bf16.mxu0 0
    %145 = vmatpush1.bf16.msra.mxu0 %v132
    %146 = vmatprep.subr.bf16.mxu0 0
    %147 = vmatpush1.bf16.msra.mxu0 %v131
    %148 = vmatprep.subr.bf16.mxu0 0
    %149 = vmatpush1.bf16.msra.mxu0 %v130
    %150 = vmatprep.subr.bf16.mxu0 0
    %151 = vmatpush1.bf16.msra.mxu0 %v129
    %152 = vmatprep.subr.bf16.mxu0 0
    %153 = vmatpush1.bf16.msra.mxu0 %v128
    %154 = vmatprep.subr.bf16.mxu0 0
    %155 = vmatpush1.bf16.msra.mxu0 %v127
    %156 = vmatprep.subr.bf16.mxu0 0
    %157 = vmatpush1.bf16.msra.mxu0 %v126
    %158 = vmatprep.subr.bf16.mxu0 0
    %159 = vmatpush2.bf16.msra.mxu0 0
    %160 = vmatprep.subr.bf16.mxu0 0
    %161 = vmatpush2.bf16.msra.mxu0 0
    %162 = vmatprep.subr.bf16.mxu0 0
    %163 = vmatpush2.bf16.msra.mxu0 0
    %164 = vmatprep.subr.bf16.mxu0 0
    %165 = vmatpush2.bf16.msra.mxu0 0
    %166 = vmatprep.subr.bf16.mxu0 0
    %167 = vmatpush2.bf16.msra.mxu0 0
    %168 = vmatprep.subr.bf16.mxu0 0
    %169 = vmatpush2.bf16.msra.mxu0 0
    %170 = vmatprep.subr.bf16.mxu0 0
    %171 = vmatpush2.bf16.msra.mxu0 0
    %172 = vmatprep.subr.bf16.mxu0 0
    %173 = vmatpush2.bf16.msra.mxu0 0
    %174 = vmatprep.mubr.bf16.mxu0 0
    %175 = vmatmul.mubr.bf16.gmra.mxu0 %v92
    %v176 = vpop.f32.mrf.mxu0
    %v177 = vadd.f32 %v86, %v176
    %v178 = vpop.f32.mrf.mxu0
    %v179 = vpop.f32.mrf.mxu0
    %v180 = vadd.f32 %v86, %v179
    %v181 = vpop.f32.mrf.mxu0
    %182 = vdwg.mxu0
    %v183 = vmul.f32 %v177, 0.5
    %v184 = vmul.f32 %v180, 0.5
    %v185 = vtanh.pop %v183
    %v186 = vtanh.pop %v184
    %v187 = vmul.f32 %v185, 0.5
    %v188 = vmul.f32 %v186, 0.5
    %v189 = vadd.f32 %v187, 0.5
    %v190 = vadd.f32 %v188, 0.5
    %v191 = vpack.c.bf16 %v190, %v189
    %v192 = vld [vmem:[#allocation7] sm:$0xf]
    %v193 = vld [vmem:[#allocation7 + $0x4] sm:$0xf]
    %v194 = vld [vmem:[#allocation7 + $0x8] sm:$0xf]
    %v195 = vld [vmem:[#allocation7 + $0xc] sm:$0xf]
    %v196 = vld [vmem:[#allocation7 + $0x10] sm:$0xf]
    %v197 = vld [vmem:[#allocation7 + $0x14] sm:$0xf]
    %v198 = vld [vmem:[#allocation7 + $0x18] sm:$0xf]
    %v199 = vld [vmem:[#allocation7 + $0x1c] sm:$0xf]
    %v200 = vld [vmem:[#allocation7 + $0x20] sm:$0xf]
    %v201 = vld [vmem:[#allocation7 + $0x24] sm:$0xf]
    %v202 = vld [vmem:[#allocation7 + $0x28] sm:$0xf]
    %v203 = vld [vmem:[#allocation7 + $0x2c] sm:$0xf]
    %v204 = vld [vmem:[#allocation7 + $0x30] sm:$0xf]
    %v205 = vld [vmem:[#allocation7 + $0x34] sm:$0xf]
    %v206 = vld [vmem:[#allocation7 + $0x38] sm:$0xf]
    %v207 = vld [vmem:[#allocation7 + $0x3c] sm:$0xf]
    %v208 = vld [vmem:[%s4] sm:$0x1]
    %v210 = vlaneseq
    %v211 = vshrl.u32 %v210, 7
    %v212 = vsub.s32 0, %v211
    %v213 = vrot.slane %v208, %v212
    %v231 = vunpack.c.l.b16 %v192
    %v232 = vunpack.c.l.b16 %v193
    %v233 = vunpack.c.l.b16 %v194
    %v234 = vunpack.c.l.b16 %v195
    %v235 = vunpack.c.l.b16 %v196
    %v236 = vunpack.c.l.b16 %v197
    %v237 = vunpack.c.l.b16 %v198
    %v238 = vunpack.c.l.b16 %v199
    %v239 = vunpack.c.l.b16 %v200
    %v240 = vunpack.c.l.b16 %v201
    %v241 = vunpack.c.l.b16 %v202
    %v242 = vunpack.c.l.b16 %v203
    %v243 = vunpack.c.l.b16 %v204
    %v244 = vunpack.c.l.b16 %v205
    %v245 = vunpack.c.l.b16 %v206
    %v246 = vunpack.c.l.b16 %v207
    %v247 = vpack.c.b16 %v232, %v231
    %v248 = vpack.c.b16 %v234, %v233
    %v249 = vpack.c.b16 %v236, %v235
    %v250 = vpack.c.b16 %v238, %v237
    %v251 = vpack.c.b16 %v240, %v239
    %v252 = vpack.c.b16 %v242, %v241
    %v253 = vpack.c.b16 %v244, %v243
    %v254 = vpack.c.b16 %v246, %v245
    %263 = vmatprep.subr.bf16.mxu0 0
    %264 = vmatpush1.bf16.msra.mxu0 %v254
    %265 = vmatprep.subr.bf16.mxu0 0
    %266 = vmatpush1.bf16.msra.mxu0 %v253
    %267 = vmatprep.subr.bf16.mxu0 0
    %268 = vmatpush1.bf16.msra.mxu0 %v252
    %269 = vmatprep.subr.bf16.mxu0 0
    %270 = vmatpush1.bf16.msra.mxu0 %v251
    %271 = vmatprep.subr.bf16.mxu0 0
    %272 = vmatpush1.bf16.msra.mxu0 %v250
    %273 = vmatprep.subr.bf16.mxu0 0
    %274 = vmatpush1.bf16.msra.mxu0 %v249
    %275 = vmatprep.subr.bf16.mxu0 0
    %276 = vmatpush1.bf16.msra.mxu0 %v248
    %277 = vmatprep.subr.bf16.mxu0 0
    %278 = vmatpush1.bf16.msra.mxu0 %v247
    %279 = vmatprep.subr.bf16.mxu0 0
    %280 = vmatpush2.bf16.msra.mxu0 0
    %281 = vmatprep.subr.bf16.mxu0 0
    %282 = vmatpush2.bf16.msra.mxu0 0
    %283 = vmatprep.subr.bf16.mxu0 0
    %284 = vmatpush2.bf16.msra.mxu0 0
    %285 = vmatprep.subr.bf16.mxu0 0
    %286 = vmatpush2.bf16.msra.mxu0 0
    %287 = vmatprep.subr.bf16.mxu0 0
    %288 = vmatpush2.bf16.msra.mxu0 0
    %289 = vmatprep.subr.bf16.mxu0 0
    %290 = vmatpush2.bf16.msra.mxu0 0
    %291 = vmatprep.subr.bf16.mxu0 0
    %292 = vmatpush2.bf16.msra.mxu0 0
    %293 = vmatprep.subr.bf16.mxu0 0
    %294 = vmatpush2.bf16.msra.mxu0 0
    %295 = vmatprep.mubr.bf16.mxu0 0
    %296 = vmatmul.mubr.bf16.gmra.mxu0 %v191
    %v297 = vpop.f32.mrf.mxu0
    %v298 = vadd.f32 %v213, %v297
    %v299 = vpop.f32.mrf.mxu0
    %v300 = vpop.f32.mrf.mxu0
    %v301 = vadd.f32 %v213, %v300
    %v302 = vpop.f32.mrf.mxu0
    %303 = vdwg.mxu0
    %304 = vst [vmem:[#allocation8] sm:$0xff] %v298
    %305 = vst [vmem:[#allocation8 + $0x8] sm:$0xff] %v301
    // Predicated region
    $region34: #{tpu_custom_call.1} parent=1 // pred_check
      _
    $region35: #{tpu_custom_call.1} parent=1 // pred_check_branch
      %307 = sbr.rel (0) target = $region37
    $region36: #{tpu_custom_call.1} parent=1 // pred_region
      %s309 = ssub.s32 256, 256
      %310 = vsyncadd [#allocation4], %s309
      %s311 = sshll.u32 [#allocation8], 4
      %s312 = int_to_ptr.vmem [resolvable:$true] %s311
      %317 = dma.vmem_to_hbm [thread:$0]  %s312, 256, %s5, [#allocation4], 128, 128, 8
    $region37: #{tpu_custom_call.1} parent=1 // pred_fallthru
      _
    // Predicated region
    $region38: #{tpu_custom_call.1} parent=1 // pred_check
      _
    $region39: #{tpu_custom_call.1} parent=1 // pred_check_branch
      %319 = sbr.rel (0) target = $region41
    $region40: #{tpu_custom_call.1} parent=1 // pred_region
      %320 = dma.done [#allocation4], 256
    $region41: #{tpu_custom_call.1} parent=1 // pred_fallthru
      _
    %321 = vsyncpa [#allocation3], 1
    %322 = vsyncpa [#allocation6], 1
    %323 = vsyncpa [#allocation4], 1

</llo_original>
